<compile_context>
chip_gen: v6e
topology: v6e:2x2x1
jax: 0.10.0
libtpu: 0.0.40
codegen_flags: <defaults>
</compile_context>

<pallas_src>
import jax
import jax.numpy as jnp
from jax import lax
from jax.experimental import pallas as pl
from jax.experimental.pallas import tpu as pltpu

_LANE = 128
_SUBLANE = 8


def _round_up(x, m):
    return ((x + m - 1) // m) * m


def _tile_vmem_bytes(rows, cols, itemsize):
    # VMEM footprint of one (rows, cols) block after (8, 128) tiling/padding.
    return _round_up(max(rows, 1), _SUBLANE) * _round_up(max(cols, 1), _LANE) * itemsize


# --------------------------------------------------------------------------
# Kernel 1: gate / routing (runs once per token tile, off the hot path).
# --------------------------------------------------------------------------
def _gate_kernel(x_ref, wg_ref, w_ref, scores_ref):
    # x_ref:      (tT, H)  hidden-state tile
    # wg_ref:     (H, E)   gate weight (grid-invariant)
    # w_ref:      (tT, E)  dense renormalized top-2 routing weights (eb dtype)
    # scores_ref: (tT, E)  softmax gate scores (f32, for the aux loss)
    logits = jnp.dot(x_ref[...], wg_ref[...], preferred_element_type=jnp.float32)
    logits = logits - jnp.max(logits, axis=-1, keepdims=True)
    ex = jnp.exp(logits)
    scores = ex / jnp.sum(ex, axis=-1, keepdims=True)           # (tT, E)

    E = scores.shape[-1]
    eidx = lax.broadcasted_iota(jnp.int32, scores.shape, 1)

    # top-1 / top-2; lowest index wins ties (matches torch.topk first-occurrence).
    s1 = jnp.max(scores, axis=-1, keepdims=True)
    idx1 = jnp.min(jnp.where(scores == s1, eidx, E), axis=-1, keepdims=True)
    mask1 = eidx == idx1

    masked = jnp.where(mask1, -jnp.inf, scores)
    s2 = jnp.max(masked, axis=-1, keepdims=True)
    idx2 = jnp.min(jnp.where(masked == s2, eidx, E), axis=-1, keepdims=True)
    mask2 = eidx == idx2

    # Renormalized top-2 weights, exact divide (once per token tile => free).
    w = jnp.where(mask1 | mask2, scores, 0.0) / (s1 + s2)
    w_ref[...] = w.astype(w_ref.dtype)
    scores_ref[...] = scores.astype(scores_ref.dtype)


# --------------------------------------------------------------------------
# Kernel 2: hot path — (tT, E) @ (E, tV) MXU matmul, lane-dense bias store.
# --------------------------------------------------------------------------
def _bias_kernel(w_ref, eb_ref, bias_ref):
    bias_ref[...] = jnp.dot(
        w_ref[...], eb_ref[...], preferred_element_type=jnp.float32
    ).astype(bias_ref.dtype)


def moe_bias_forward(hidden_states, gate_w, expert_biases, num_experts,
                     return_aux_loss=True, token_tile=None, vocab_tile=None):
    """hidden_states: (B, S, H) or (T, H); gate_w: (H, E); expert_biases: (E, V)."""
    orig_shape = hidden_states.shape
    H = hidden_states.shape[-1]
    x2d = hidden_states.reshape(-1, H)
    T = x2d.shape[0]
    E, V = expert_biases.shape
    assert E >= 2, "top-2 routing needs at least 2 experts"
    out_dtype = hidden_states.dtype

    x_isz = jnp.dtype(x2d.dtype).itemsize
    g_isz = jnp.dtype(gate_w.dtype).itemsize
    e_isz = jnp.dtype(expert_biases.dtype).itemsize
    o_isz = jnp.dtype(out_dtype).itemsize

    # ---- Tile selection: (8, 128)-aligned, budgeted for v7x's 64 MiB VMEM so
    # double-buffering stays alive on every generation.  Large vocab tiles are
    # the priority: the kernel is HBM-write-bound on the (T, V) bias output.
    budget = 44 * 1024 * 1024
    tT = int(token_tile) if token_tile else min(256, _round_up(T, _SUBLANE))
    tT = max(_SUBLANE, _round_up(tT, _SUBLANE))
    tV = int(vocab_tile) if vocab_tile else min(4096, _round_up(V, _LANE))
    tV = max(_LANE, _round_up(tV, _LANE))

    def _bias_bytes(tt, tv):
        return 2 * (_tile_vmem_bytes(tt, E, e_isz)       # routing-weights tile
                    + _tile_vmem_bytes(E, tv, e_isz)      # expert-bias tile
                    + _tile_vmem_bytes(tt, tv, o_isz))    # bias output tile

    def _gate_bytes(tt):
        return 2 * (_tile_vmem_bytes(tt, H, x_isz)        # hidden-state tile
                    + _tile_vmem_bytes(H, E, g_isz)       # gate weight (resident)
                    + _tile_vmem_bytes(tt, E, e_isz)      # w output tile
                    + _tile_vmem_bytes(tt, E, 4))         # scores output tile

    while tV > _LANE and _bias_bytes(tT, tV) > budget:
        tV = max(_LANE, _round_up(tV // 2, _LANE))
    while tT > _SUBLANE and max(_bias_bytes(tT, tV), _gate_bytes(tT)) > budget:
        tT = max(_SUBLANE, _round_up(tT // 2, _SUBLANE))

    bias_vmem = int(min(max(int(_bias_bytes(tT, tV) * 1.5) + (2 << 20), 32 << 20), 56 << 20))
    gate_vmem = int(min(max(int(_gate_bytes(tT) * 1.5) + (2 << 20), 32 << 20), 56 << 20))

    # ---- Pad T / V up to tile multiples (no full-dim fallback blocks).
    Tp = _round_up(T, tT)
    Vp = _round_up(V, tV)
    if Tp != T:
        x2d = jnp.pad(x2d, ((0, Tp - T), (0, 0)))
    eb = expert_biases if Vp == V else jnp.pad(expert_biases, ((0, 0), (0, Vp - V)))

    # ---- Pass 1: gate / routing (tiny; one block per token tile).
    w_dense, scores = pl.pallas_call(
        _gate_kernel,
        out_shape=(
            jax.ShapeDtypeStruct((Tp, E), expert_biases.dtype),
            jax.ShapeDtypeStruct((Tp, E), jnp.float32),
        ),
        grid_spec=pltpu.PrefetchScalarGridSpec(
            num_scalar_prefetch=0,
            grid=(Tp // tT,),
            in_specs=[
                pl.BlockSpec((tT, H), lambda i: (i, 0)),
                pl.BlockSpec((H, E), lambda i: (0, 0)),
            ],
            out_specs=[
                pl.BlockSpec((tT, E), lambda i: (i, 0)),
                pl.BlockSpec((tT, E), lambda i: (i, 0)),
            ],
        ),
        compiler_params=pltpu.CompilerParams(
            dimension_semantics=("parallel",),
            vmem_limit_bytes=gate_vmem,
        ),
    )(x2d, gate_w)

    # ---- Pass 2: hot, store-bound bias kernel.  Every (i, j) tile is
    # independent, so both grid axes are "parallel" (megacore-friendly).
    bias2d = pl.pallas_call(
        _bias_kernel,
        out_shape=jax.ShapeDtypeStruct((Tp, Vp), out_dtype),
        grid_spec=pltpu.PrefetchScalarGridSpec(
            num_scalar_prefetch=0,
            grid=(Tp // tT, Vp // tV),
            in_specs=[
                pl.BlockSpec((tT, E), lambda i, j: (i, 0)),   # routing weights
                pl.BlockSpec((E, tV), lambda i, j: (0, j)),   # expert-bias vocab tile
            ],
            out_specs=pl.BlockSpec((tT, tV), lambda i, j: (i, j)),  # lane-dense
        ),
        compiler_params=pltpu.CompilerParams(
            dimension_semantics=("parallel", "parallel"),
            vmem_limit_bytes=bias_vmem,
        ),
    )(w_dense, eb)

    if Tp != T or Vp != V:
        bias2d = bias2d[:T, :V]
    bias = bias2d.reshape(orig_shape[:-1] + (V,))

    aux_loss = jnp.float32(0.0)
    if return_aux_loss:
        # Tiny (T, E) -> scalar reduction: plain JAX glue (padded rows dropped).
        expert_usage = scores[:T].mean(axis=0)
        aux_loss = (expert_usage * jnp.log(expert_usage)).sum() * num_experts
    return bias, aux_loss


# --------------------------------------------------------------------------
# Pure-JAX reference (mirrors the torch module) for verification.
# --------------------------------------------------------------------------
def _reference(hidden_states, gate_w, expert_biases, num_experts, top_k=2):
    orig_shape = hidden_states.shape
    x2d = hidden_states.reshape(-1, hidden_states.shape[-1])
    logits = x2d @ gate_w
    scores = jax.nn.softmax(logits, axis=-1)
    topk_scores, topk_idx = lax.top_k(scores, top_k)
    topk_scores = topk_scores / topk_scores.sum(-1, keepdims=True)
    bias = jnp.zeros((x2d.shape[0], expert_biases.shape[1]), hidden_states.dtype)
    for i in range(top_k):
        bias = bias + topk_scores[:, i:i + 1] * expert_biases[topk_idx[:, i]]
    usage = scores.mean(0)
    aux = (usage * jnp.log(usage)).sum() * num_experts
    return bias.reshape(orig_shape[:-1] + (expert_biases.shape[1],)), aux


if __name__ == "__main__":
    B, S, H = 2, 8, 32
    E, V, TOP_K = 16, 256, 2

    key = jax.random.PRNGKey(0)
    kx, kg, kb = jax.random.split(key, 3)
    hidden_states = jax.random.normal(kx, (B, S, H), dtype=jnp.float32)
    gate_w = jax.random.normal(kg, (H, E), dtype=jnp.float32) * 0.05   # gate (no bias)
    expert_biases = jax.random.normal(kb, (E, V), dtype=jnp.float32) * 0.02

    bias, aux_loss = moe_bias_forward(hidden_states, gate_w, expert_biases, E)
    jax.block_until_ready((bias, aux_loss))

    ref_bias, ref_aux = _reference(hidden_states, gate_w, expert_biases, E, TOP_K)
    assert bias.shape == (B, S, V)
    # Exact top-2 renormalization now; tolerance only absorbs MXU rounding.
    assert jnp.allclose(bias, ref_bias, atol=5e-4, rtol=5e-4)
    assert jnp.allclose(aux_loss, ref_aux, atol=1e-5, rtol=1e-5)

    print("KERNEL_OK")
</pallas_src>

<mosaic_0001>
module attributes {stable_mosaic.version = 11 : i64} {
  func.func @_gate_kernel(%arg0: i32, %arg1: memref<16x32xf32, #tpu.memory_space<vmem>>, %arg2: memref<32x16xf32, #tpu.memory_space<vmem>>, %arg3: memref<16x16xf32, #tpu.memory_space<vmem>>, %arg4: memref<16x16xf32, #tpu.memory_space<vmem>>) attributes {dimension_semantics = [#tpu.dimension_semantics<parallel>], iteration_bounds = array<i64: 1>, scalar_prefetch = 0 : i64, scratch_operands = 0 : i64, tpu.core_type = #tpu.core_type<tc>, window_params = [{transform_indices = @transform_0, window_bounds = array<i64: 16, 32>}, {pipeline_mode = #tpu.pipeline_mode<synchronous>, transform_indices = @transform_1, window_bounds = array<i64: 32, 16>}, {transform_indices = @transform_2, window_bounds = array<i64: 16, 16>}, {transform_indices = @transform_3, window_bounds = array<i64: 16, 16>}]} {
    %c0 = arith.constant 0 : index
    %c0_0 = arith.constant 0 : index
    %0 = vector.load %arg1[%c0, %c0_0] : memref<16x32xf32, #tpu.memory_space<vmem>>, vector<16x32xf32>
    %c0_1 = arith.constant 0 : index
    %c0_2 = arith.constant 0 : index
    %1 = vector.load %arg2[%c0_1, %c0_2] : memref<32x16xf32, #tpu.memory_space<vmem>>, vector<32x16xf32>
    %cst = arith.constant dense<0.000000e+00> : vector<16x16xf32>
    %2 = tpu.matmul %0, %1, %cst {dimension_numbers = #tpu.dot_dimension_numbers<[1], [0], [0], [1], [0, 0, 1, 1], [], []>} : vector<16x32xf32>, vector<32x16xf32>, vector<16x16xf32> -> vector<16x16xf32>
    %cst_3 = arith.constant dense<0xFF800000> : vector<16xf32>
    %3 = vector.multi_reduction <maximumf>, %2, %cst_3 [1] : vector<16x16xf32> to vector<16xf32>
    %4 = vector.shape_cast %3 : vector<16xf32> to vector<16x1xf32>
    %5 = vector.broadcast %4 : vector<16x1xf32> to vector<16x16xf32>
    %6 = arith.subf %2, %5 : vector<16x16xf32>
    %7 = math.exp %6 : vector<16x16xf32>
    %cst_4 = arith.constant dense<0.000000e+00> : vector<16xf32>
    %8 = vector.multi_reduction <add>, %7, %cst_4 [1] : vector<16x16xf32> to vector<16xf32>
    %9 = vector.shape_cast %8 : vector<16xf32> to vector<16x1xf32>
    %10 = vector.broadcast %9 : vector<16x1xf32> to vector<16x16xf32>
    %11 = arith.divf %7, %10 : vector<16x16xf32>
    %12 = tpu.iota {dimensions = array<i32: 1>} : vector<16x16xi32>
    %cst_5 = arith.constant dense<0xFF800000> : vector<16xf32>
    %13 = vector.multi_reduction <maximumf>, %11, %cst_5 [1] : vector<16x16xf32> to vector<16xf32>
    %14 = vector.shape_cast %13 : vector<16xf32> to vector<16x1xf32>
    %15 = vector.broadcast %14 : vector<16x1xf32> to vector<16x16xf32>
    %16 = arith.cmpf oeq, %11, %15 : vector<16x16xf32>
    %c16_i32 = arith.constant 16 : i32
    %17 = vector.broadcast %c16_i32 : i32 to vector<16x16xi32>
    %18 = arith.select %16, %12, %17 : vector<16x16xi1>, vector<16x16xi32>
    %cst_6 = arith.constant dense<2147483647> : vector<16xi32>
    %19 = vector.multi_reduction <minsi>, %18, %cst_6 [1] : vector<16x16xi32> to vector<16xi32>
    %20 = vector.shape_cast %19 : vector<16xi32> to vector<16x1xi32>
    %21 = vector.broadcast %20 : vector<16x1xi32> to vector<16x16xi32>
    %22 = arith.cmpi eq, %12, %21 : vector<16x16xi32>
    %cst_7 = arith.constant 0xFF800000 : f32
    %23 = vector.broadcast %cst_7 : f32 to vector<16x16xf32>
    %24 = arith.select %22, %23, %11 : vector<16x16xi1>, vector<16x16xf32>
    %cst_8 = arith.constant dense<0xFF800000> : vector<16xf32>
    %25 = vector.multi_reduction <maximumf>, %24, %cst_8 [1] : vector<16x16xf32> to vector<16xf32>
    %26 = vector.shape_cast %25 : vector<16xf32> to vector<16x1xf32>
    %27 = vector.broadcast %26 : vector<16x1xf32> to vector<16x16xf32>
    %28 = arith.cmpf oeq, %24, %27 : vector<16x16xf32>
    %c16_i32_9 = arith.constant 16 : i32
    %29 = vector.broadcast %c16_i32_9 : i32 to vector<16x16xi32>
    %30 = arith.select %28, %12, %29 : vector<16x16xi1>, vector<16x16xi32>
    %cst_10 = arith.constant dense<2147483647> : vector<16xi32>
    %31 = vector.multi_reduction <minsi>, %30, %cst_10 [1] : vector<16x16xi32> to vector<16xi32>
    %32 = vector.shape_cast %31 : vector<16xi32> to vector<16x1xi32>
    %33 = vector.broadcast %32 : vector<16x1xi32> to vector<16x16xi32>
    %34 = arith.cmpi eq, %12, %33 : vector<16x16xi32>
    %35 = arith.ori %22, %34 : vector<16x16xi1>
    %cst_11 = arith.constant 0.000000e+00 : f32
    %36 = vector.broadcast %cst_11 : f32 to vector<16x16xf32>
    %37 = arith.select %35, %11, %36 : vector<16x16xi1>, vector<16x16xf32>
    %38 = arith.addf %14, %26 : vector<16x1xf32>
    %39 = vector.broadcast %38 : vector<16x1xf32> to vector<16x16xf32>
    %40 = arith.divf %37, %39 : vector<16x16xf32>
    %c0_12 = arith.constant 0 : index
    %c0_13 = arith.constant 0 : index
    %41 = vector.load %arg3[%c0_12, %c0_13] : memref<16x16xf32, #tpu.memory_space<vmem>>, vector<16x16xf32>
    tpu.vector_store %arg3[%c0_12, %c0_13], %40 {strides = array<i32>} : memref<16x16xf32, #tpu.memory_space<vmem>>, vector<16x16xf32>,
    %c0_14 = arith.constant 0 : index
    %c0_15 = arith.constant 0 : index
    %42 = vector.load %arg4[%c0_14, %c0_15] : memref<16x16xf32, #tpu.memory_space<vmem>>, vector<16x16xf32>
    tpu.vector_store %arg4[%c0_14, %c0_15], %11 {strides = array<i32>} : memref<16x16xf32, #tpu.memory_space<vmem>>, vector<16x16xf32>,
    return
  }
  func.func @transform_0(%arg0: i32) -> (i32, i32) {
    %c0_i32 = arith.constant 0 : i32
    %c0_i32_0 = arith.constant 0 : i32
    return %arg0, %c0_i32 : i32, i32
  }
  func.func @transform_1(%arg0: i32) -> (i32, i32) {
    %c0_i32 = arith.constant 0 : i32
    %c0_i32_0 = arith.constant 0 : i32
    %c0_i32_1 = arith.constant 0 : i32
    return %c0_i32, %c0_i32_0 : i32, i32
  }
  func.func @transform_2(%arg0: i32) -> (i32, i32) {
    %c0_i32 = arith.constant 0 : i32
    %c0_i32_0 = arith.constant 0 : i32
    return %arg0, %c0_i32 : i32, i32
  }
  func.func @transform_3(%arg0: i32) -> (i32, i32) {
    %c0_i32 = arith.constant 0 : i32
    %c0_i32_0 = arith.constant 0 : i32
    return %arg0, %c0_i32 : i32, i32
  }
}

</mosaic_0001>

<llo_original>
// kernel: tpu_custom_call.1
$region0: #{tpu_custom_call.1}
  #allocation0 [shape = 'u32[]', space=smem, size = 0x4, offset = 0x4, fixed_abs, tag = 'smem constant byte address 0x4 - core index']
  #allocation1 [shape = 'u32[144,128]{1,0:T(1,128)}', space=vmem, size = 0x12000, scoped, tag = 'internal scratch']
  %s0 = inlined_call_operand.vmem [shape: f32[16,32], index: 0, kind: input, shape index: {}]
  %s1 = inlined_call_operand.vmem [shape: f32[32,16], index: 1, kind: input, shape index: {}]
  %s2 = inlined_call_operand.hbm [shape: f32[16,16], index: 2, kind: output, shape index: {0}]
  %s3 = inlined_call_operand.hbm [shape: f32[16,16], index: 3, kind: output, shape index: {1}]
  %4 = xla_tuple %s2, %s3
  %s5 = sld [smem:[#allocation0]]
  $region26: #{tpu_custom_call.1} parent=0
    _
  %s7 = ssub.s32 1, %s5
  %s8 = scalar_select 0, %s7, %s5
  $region1: #{tpu_custom_call.1} parent=0
    #allocation2 [shape = 'u8[8192]{0}', space=vmem, size = 0x2000, scoped, tag = 'output window, operand 0, single buffered']
    #allocation3 [shape = 's32[1]{0}', space=sflag, size = 0x4, scoped, tag = 'scoped memory for tpu_custom_call.1']
    #allocation4 [shape = 'u8[8192]{0}', space=vmem, size = 0x2000, scoped, tag = 'output window, operand 1, single buffered']
    #allocation5 [shape = 's32[1]{0}', space=sflag, size = 0x4, scoped, tag = 'scoped memory for tpu_custom_call.1']
    %9 = vsyncpa [#allocation3], 0
    %10 = vsyncpa [#allocation5], 0
    // Predicated region
    $region2: #{tpu_custom_call.1} parent=1 // pred_check
      _
    $region3: #{tpu_custom_call.1} parent=1 // pred_check_branch
      %12 = sbr.rel (0) target = $region5
    $region4: #{tpu_custom_call.1} parent=1 // pred_region
      _
    $region5: #{tpu_custom_call.1} parent=1 // pred_fallthru
      _
    // Predicated region
    $region6: #{tpu_custom_call.1} parent=1 // pred_check
      _
    $region7: #{tpu_custom_call.1} parent=1 // pred_check_branch
      %14 = sbr.rel (0) target = $region9
    $region8: #{tpu_custom_call.1} parent=1 // pred_region
      _
    $region9: #{tpu_custom_call.1} parent=1 // pred_fallthru
      _
    %v15 = vld [vmem:[%s0] sm:$0xff]
    %v16 = vld [vmem:[%s0 + $0x8] sm:$0xff]
    %v17 = vld [vmem:[%s1] sm:$0xff]
    %v18 = vld [vmem:[%s1 + $0x8] sm:$0xff]
    %v19 = vld [vmem:[%s1 + $0x10] sm:$0xff]
    %v20 = vld [vmem:[%s1 + $0x18] sm:$0xff]
    %vm21 = vcmask 261120
    %v23 = vsel %vm21, %v15, 0
    %v26 = vsel %vm21, %v16, 0
    %28 = vmatprep.subr.mxu0 0.0
    %29 = vmatpush1.msra.mxu0 0.0
    %30 = vmatprep.subr.mxu0 0.0
    %31 = vmatpush1.msra.mxu0 0.0
    %32 = vmatprep.subr.mxu0 0.0
    %33 = vmatpush1.msra.mxu0 0.0
    %34 = vmatprep.subr.mxu0 0.0
    %35 = vmatpush1.msra.mxu0 0.0
    %36 = vmatprep.subr.mxu0 0.0
    %37 = vmatpush1.msra.mxu0 0.0
    %38 = vmatprep.subr.mxu0 0.0
    %39 = vmatpush1.msra.mxu0 0.0
    %40 = vmatprep.subr.mxu0 0.0
    %41 = vmatpush1.msra.mxu0 0.0
    %42 = vmatprep.subr.mxu0 0.0
    %43 = vmatpush1.msra.mxu0 0.0
    %44 = vmatprep.subr.mxu0 0.0
    %45 = vmatpush1.msra.mxu0 0.0
    %46 = vmatprep.subr.mxu0 0.0
    %47 = vmatpush1.msra.mxu0 0.0
    %48 = vmatprep.subr.mxu0 0.0
    %49 = vmatpush1.msra.mxu0 0.0
    %50 = vmatprep.subr.mxu0 0.0
    %51 = vmatpush1.msra.mxu0 0.0
    %52 = vmatprep.subr.mxu0 0.0
    %53 = vmatpush1.msra.mxu0 %v20
    %54 = vmatprep.subr.mxu0 0.0
    %55 = vmatpush1.msra.mxu0 %v19
    %56 = vmatprep.subr.mxu0 0.0
    %57 = vmatpush1.msra.mxu0 %v18
    %58 = vmatprep.subr.mxu0 0.0
    %59 = vmatpush1.msra.mxu0 %v17
    %60 = vmatprep.subr.mxu0 0.0
    %61 = vmatpush2.msra.mxu0 0.0
    %62 = vmatprep.subr.mxu0 0.0
    %63 = vmatpush2.msra.mxu0 0.0
    %64 = vmatprep.subr.mxu0 0.0
    %65 = vmatpush2.msra.mxu0 0.0
    %66 = vmatprep.subr.mxu0 0.0
    %67 = vmatpush2.msra.mxu0 0.0
    %68 = vmatprep.subr.mxu0 0.0
    %69 = vmatpush2.msra.mxu0 0.0
    %70 = vmatprep.subr.mxu0 0.0
    %71 = vmatpush2.msra.mxu0 0.0
    %72 = vmatprep.subr.mxu0 0.0
    %73 = vmatpush2.msra.mxu0 0.0
    %74 = vmatprep.subr.mxu0 0.0
    %75 = vmatpush2.msra.mxu0 0.0
    %76 = vmatprep.subr.mxu0 0.0
    %77 = vmatpush2.msra.mxu0 0.0
    %78 = vmatprep.subr.mxu0 0.0
    %79 = vmatpush2.msra.mxu0 0.0
    %80 = vmatprep.subr.mxu0 0.0
    %81 = vmatpush2.msra.mxu0 0.0
    %82 = vmatprep.subr.mxu0 0.0
    %83 = vmatpush2.msra.mxu0 0.0
    %84 = vmatprep.subr.mxu0 0.0
    %85 = vmatpush2.msra.mxu0 0.0
    %86 = vmatprep.subr.mxu0 0.0
    %87 = vmatpush2.msra.mxu0 0.0
    %88 = vmatprep.subr.mxu0 0.0
    %89 = vmatpush2.msra.mxu0 0.0
    %90 = vmatprep.subr.mxu0 0.0
    %91 = vmatpush2.msra.mxu0 0.0
    %92 = vmatprep.mubr.f32.mxu0 0.0
    %93 = vmatmul.mubr.f32.gmra.mxu0 %v23
    %v94 = vpop.f32.mrf.mxu0
    %v95 = vadd.f32 0.0, %v94
    %v96 = vpop.f32.mrf.mxu0
    %97 = vmatprep.mubr.f32.mxu0 0.0
    %98 = vmatmul.mubr.f32.gmra.mxu0 %v26
    %v99 = vpop.f32.mrf.mxu0
    %v100 = vadd.f32 0.0, %v99
    %v101 = vpop.f32.mrf.mxu0
    %102 = vdwg.mxu0
    %vm103 = vcmask 130048
    %v104 = vsel %vm103, %v95, -inf
    %105 = vmax.xlane.f32.xlu0 %v104
    %v106 = vpop.xlane.xlu0 %105
    %v107 = vsel %vm103, %v100, -inf
    %108 = vmax.xlane.f32.xlu0 %v107
    %v109 = vpop.xlane.xlu0 %108
    %v110 = vsub.f32 %v95, %v106
    %v111 = vsub.f32 %v100, %v109
    %v112 = vmul.f32 %v110, 1.442695
    %v113 = vpow.pop %v112
    %v114 = vmul.f32 %v111, 1.442695
    %v115 = vpow.pop %v114
    %v116 = vsel %vm103, %v113, 0.0
    %117 = vadd.xlane.f32.xlu0 %v116
    %v118 = vpop.xlane.xlu0 %117
    %v119 = vsel %vm103, %v115, 0.0
    %120 = vadd.xlane.f32.xlu0 %v119
    %v121 = vpop.xlane.xlu0 %120
    %v122 = vrcp.pop %v118
    %v123 = vmul.f32 %v113, %v122
    %v124 = vrcp.pop %v121
    %v125 = vmul.f32 %v115, %v124
    %v126 = vlaneseq
    %v127 = vand.u32 %v126, 127
    %v128 = vsel %vm103, %v123, -inf
    %129 = vmax.xlane.f32.xlu0 %v128
    %v130 = vpop.xlane.xlu0 %129
    %v131 = vsel %vm103, %v125, -inf
    %132 = vmax.xlane.f32.xlu0 %v131
    %v133 = vpop.xlane.xlu0 %132
    %vm134 = vcmp.eq.f32.partialorder %v123, %v130
    %vm135 = vcmp.eq.f32.partialorder %v125, %v133
    %v136 = vsel %vm134, %v127, 16
    %v137 = vsel %vm135, %v127, 16
    %v138 = vsel %vm103, %v136, 2147483647
    %v139 = vand.u32 %v138, 65535
    %v140 = vshra.s32 %v138, 16
    %v141 = vcvt.s32.f32 %v139
    %v142 = vcvt.s32.f32 %v140
    %143 = vmin.xlane.f32.xlu0 %v142
    %v144 = vpop.xlane.xlu0 %143
    %vm145 = vcmp.eq.f32.partialorder %v142, %v144
    %v146 = vsel %vm145, %v141, inf
    %147 = vmin.xlane.f32.xlu0 %v146
    %v148 = vpop.xlane.xlu0 %147
    %v149 = vcvt.f32.s32 %v148
    %v150 = vcvt.f32.s32 %v144
    %v151 = vshll.u32 %v150, 16
    %v152 = vadd.s32 %v151, %v149
    %v153 = vsel %vm103, %v137, 2147483647
    %v154 = vand.u32 %v153, 65535
    %v155 = vshra.s32 %v153, 16
    %v156 = vcvt.s32.f32 %v154
    %v157 = vcvt.s32.f32 %v155
    %158 = vmin.xlane.f32.xlu0 %v157
    %v159 = vpop.xlane.xlu0 %158
    %vm160 = vcmp.eq.f32.partialorder %v157, %v159
    %v161 = vsel %vm160, %v156, inf
    %162 = vmin.xlane.f32.xlu0 %v161
    %v163 = vpop.xlane.xlu0 %162
    %v164 = vcvt.f32.s32 %v163
    %v165 = vcvt.f32.s32 %v159
    %v166 = vshll.u32 %v165, 16
    %v167 = vadd.s32 %v166, %v164
    %vm168 = vcmp.eq.s32.totalorder %v127, %v152
    %vm169 = vcmp.eq.s32.totalorder %v127, %v167
    %v170 = vsel %vm168, -inf, %v123
    %v171 = vsel %vm169, -inf, %v125
    %v172 = vsel %vm103, %v170, -inf
    %173 = vmax.xlane.f32.xlu0 %v172
    %v174 = vpop.xlane.xlu0 %173
    %v175 = vsel %vm103, %v171, -inf
    %176 = vmax.xlane.f32.xlu0 %v175
    %v177 = vpop.xlane.xlu0 %176
    %vm178 = vcmp.eq.f32.partialorder %v170, %v174
    %vm179 = vcmp.eq.f32.partialorder %v171, %v177
    %v180 = vsel %vm178, %v127, 16
    %v181 = vsel %vm179, %v127, 16
    %v182 = vsel %vm103, %v180, 2147483647
    %v183 = vand.u32 %v182, 65535
    %v184 = vshra.s32 %v182, 16
    %v185 = vcvt.s32.f32 %v183
    %v186 = vcvt.s32.f32 %v184
    %187 = vmin.xlane.f32.xlu0 %v186
    %v188 = vpop.xlane.xlu0 %187
    %vm189 = vcmp.eq.f32.partialorder %v186, %v188
    %v190 = vsel %vm189, %v185, inf
    %191 = vmin.xlane.f32.xlu0 %v190
    %v192 = vpop.xlane.xlu0 %191
    %v193 = vcvt.f32.s32 %v192
    %v194 = vcvt.f32.s32 %v188
    %v195 = vshll.u32 %v194, 16
    %v196 = vadd.s32 %v195, %v193
    %v197 = vsel %vm103, %v181, 2147483647
    %v198 = vand.u32 %v197, 65535
    %v199 = vshra.s32 %v197, 16
    %v200 = vcvt.s32.f32 %v198
    %v201 = vcvt.s32.f32 %v199
    %202 = vmin.xlane.f32.xlu0 %v201
    %v203 = vpop.xlane.xlu0 %202
    %vm204 = vcmp.eq.f32.partialorder %v201, %v203
    %v205 = vsel %vm204, %v200, inf
    %206 = vmin.xlane.f32.xlu0 %v205
    %v207 = vpop.xlane.xlu0 %206
    %v208 = vcvt.f32.s32 %v207
    %v209 = vcvt.f32.s32 %v203
    %v210 = vshll.u32 %v209, 16
    %v211 = vadd.s32 %v210, %v208
    %vm212 = vcmp.eq.s32.totalorder %v127, %v196
    %vm213 = vcmp.eq.s32.totalorder %v127, %v211
    %vm214 = vmor %vm168, %vm212
    %vm215 = vmor %vm169, %vm213
    %v216 = vsel %vm214, %v123, 0.0
    %v217 = vsel %vm215, %v125, 0.0
    %v218 = vadd.f32 %v130, %v174
    %v219 = vadd.f32 %v133, %v177
    %v220 = vrcp.pop %v218
    %v221 = vmul.f32 %v216, %v220
    %v222 = vrcp.pop %v219
    %v223 = vmul.f32 %v217, %v222
    %224 = vst.msk [vmem:[#allocation2] sm:$0xff] %vm103, %v221
    %225 = vst.msk [vmem:[#allocation2 + $0x8] sm:$0xff] %vm103, %v223
    %226 = vst.msk [vmem:[#allocation4] sm:$0xff] %vm103, %v123
    %227 = vst.msk [vmem:[#allocation4 + $0x8] sm:$0xff] %vm103, %v125
    // Predicated region
    $region10: #{tpu_custom_call.1} parent=1 // pred_check
      _
    $region11: #{tpu_custom_call.1} parent=1 // pred_check_branch
      %229 = sbr.rel (0) target = $region13
    $region12: #{tpu_custom_call.1} parent=1 // pred_region
      %s231 = ssub.s32 256, 256
      %232 = vsyncadd [#allocation3], %s231
      %s233 = sshll.u32 [#allocation2], 4
      %s234 = int_to_ptr.vmem [resolvable:$true] %s233
      %239 = dma.vmem_to_hbm [thread:$0]  %s234, 256, %s2, [#allocation3], 128, 128, 8
    $region13: #{tpu_custom_call.1} parent=1 // pred_fallthru
      _
    // Predicated region
    $region14: #{tpu_custom_call.1} parent=1 // pred_check
      _
    $region15: #{tpu_custom_call.1} parent=1 // pred_check_branch
      %241 = sbr.rel (0) target = $region17
    $region16: #{tpu_custom_call.1} parent=1 // pred_region
      %s243 = ssub.s32 256, 256
      %244 = vsyncadd [#allocation5], %s243
      %s245 = sshll.u32 [#allocation4], 4
      %s246 = int_to_ptr.vmem [resolvable:$true] %s245
      %251 = dma.vmem_to_hbm [thread:$0]  %s246, 256, %s3, [#allocation5], 128, 128, 8
    $region17: #{tpu_custom_call.1} parent=1 // pred_fallthru
      _
    // Predicated region
    $region18: #{tpu_custom_call.1} parent=1 // pred_check
      _
    $region19: #{tpu_custom_call.1} parent=1 // pred_check_branch
      %253 = sbr.rel (0) target = $region21
    $region20: #{tpu_custom_call.1} parent=1 // pred_region
      %254 = dma.done [#allocation3], 256
    $region21: #{tpu_custom_call.1} parent=1 // pred_fallthru
      _
    // Predicated region
    $region22: #{tpu_custom_call.1} parent=1 // pred_check
      _
    $region23: #{tpu_custom_call.1} parent=1 // pred_check_branch
      %256 = sbr.rel (0) target = $region25
    $region24: #{tpu_custom_call.1} parent=1 // pred_region
      %257 = dma.done [#allocation5], 256
    $region25: #{tpu_custom_call.1} parent=1 // pred_fallthru
      _
    %258 = vsyncpa [#allocation3], 1
    %259 = vsyncpa [#allocation5], 1

</llo_original>
